<compile_context>
chip_gen: v7x
topology: tpu7x:2x2x1
jax: 0.10.0
libtpu: 0.0.40
codegen_flags: <defaults>
</compile_context>

<pallas_src>
import math

import jax
import jax.numpy as jnp
from jax.experimental import pallas as pl
from jax.experimental.pallas import tpu as pltpu


# ---------------------------------------------------------------------------
# Kernel body: pure VPU elementwise subtract. Size-1 block dims of either
# operand are broadcast on the VPU; dtype promotion also happens here.
# ---------------------------------------------------------------------------
def _sub_kernel(x1_ref, x2_ref, o_ref):
    a = x1_ref[...].astype(o_ref.dtype)
    b = x2_ref[...].astype(o_ref.dtype)
    o_ref[...] = a - b


# ---------------------------------------------------------------------------
# Static helpers (all shape math is Python / trace-time).
# ---------------------------------------------------------------------------
def _cdiv(a, b):
    return -(-a // b)


def _round_up(x, m):
    return _cdiv(x, m) * m


def _sublane_multiple(*dtypes):
    """Second-minor block-dim multiple required by the narrowest dtype."""
    m = 8
    for dt in dtypes:
        m = max(m, 32 // max(1, jnp.dtype(dt).itemsize))
    return m


def _block_budget_bytes():
    """Per-operand block budget.

    ~2 MiB -> <= 12 MiB live with default double-buffering (fits v5e's 16 MiB
    default scoped VMEM; ~85% of roofline already on v6e). v7x gets ~4 MiB
    (24 MiB of its 32 MiB default) to amortize the ~0.35us/step overhead
    against its ~3.2 TB/s per-TC HBM bandwidth.
    """
    try:
        kind = jax.devices()[0].device_kind.lower()
    except Exception:  # defensive: fall back to the size that fits everywhere
        kind = ""
    if "v7" in kind or "7x" in kind:
        return 4 * 1024 * 1024
    return 2 * 1024 * 1024


def _plan_tiles(rows, cols, itemsize, sub, prefer_split=True):
    """Pick a (row_tile, col_tile) block for a (rows, cols) elementwise op."""
    budget = _block_budget_bytes()
    # Column tile: whole rows when they fit with at least `sub` sublanes, else
    # the largest lane-aligned width that does (partial trailing column block
    # is handled automatically by Pallas).
    max_cols = max(128, budget // (itemsize * sub))
    ct = cols if _round_up(cols, 128) <= max_cols else (max_cols // 128) * 128
    # Row tile: as many sublane-aligned rows as fit the budget (VMEM cost model
    # uses the lane-padded width).
    rows_fit = max(sub, budget // (itemsize * _round_up(ct, 128)))
    rt = (rows_fit // sub) * sub
    if rt >= rows:
        rt = rows  # a block dim equal to the full array dim is always legal
        # Megacore: keep >= 2 row blocks so the "parallel" grid axis can shard
        # across v7x's two TensorCores (harmless on single-TC v5e/v6e).
        if prefer_split and ct >= cols and rows >= 2 * sub:
            rt = _round_up(_cdiv(rows, 2), sub)
    return rt, ct


# ---------------------------------------------------------------------------
# Fast 2-D path: output collapsed to (rows, last_dim); operands map to one of
# four structured views (full / one-row / one-column / scalar).
# ---------------------------------------------------------------------------
_BLOCK_2D = {
    "full":   lambda rt, ct: (rt, ct),
    "row":    lambda rt, ct: (1, ct),   # single row, broadcast across rows
    "col":    lambda rt, ct: (rt, 1),   # single column, broadcast across cols
    "scalar": lambda rt, ct: (1, 1),
}
_INDEX_2D = {
    "full":   lambda i, j: (i, j),
    "row":    lambda i, j: (0, j),
    "col":    lambda i, j: (i, 0),
    "scalar": lambda i, j: (0, 0),
}


def _classify_2d(shape, out_shape):
    """How an operand maps onto the (rows, last-dim) collapse of the output."""
    r = len(out_shape)
    s = (1,) * (r - len(shape)) + tuple(int(d) for d in shape)
    if math.prod(s) == 1:
        return "scalar"
    if s == tuple(out_shape):
        return "full"
    if s[-1] == out_shape[-1] and all(d == 1 for d in s[:-1]):
        return "row"
    if s[-1] == 1 and s[:-1] == tuple(out_shape)[:-1]:
        return "col"
    return None


def _reshape_2d(x, kind, rows, cols):
    # These only merge leading dims / keep the minor dim, so for the common
    # aligned layouts they are metadata-only (no HBM copy).
    if kind == "scalar":
        return x.reshape(1, 1)
    if kind == "full":
        return x.reshape(rows, cols)
    if kind == "row":
        return x.reshape(1, cols)
    return x.reshape(rows, 1)  # "col"


def _sub_2d(x1, x2, kind1, kind2, out_shape, out_dtype):
    cols = out_shape[-1] if out_shape else 1
    rows = (math.prod(out_shape) // cols) if out_shape else 1
    a = _reshape_2d(x1, kind1, rows, cols)
    b = _reshape_2d(x2, kind2, rows, cols)

    itemsize = max(a.dtype.itemsize, b.dtype.itemsize,
                   jnp.dtype(out_dtype).itemsize)
    sub = _sublane_multiple(a.dtype, b.dtype, out_dtype)
    rt, ct = _plan_tiles(rows, cols, itemsize, sub, prefer_split=True)
    grid = (_cdiv(rows, rt), _cdiv(cols, ct))

    out2 = pl.pallas_call(
        _sub_kernel,
        out_shape=jax.ShapeDtypeStruct((rows, cols), out_dtype),
        grid_spec=pltpu.PrefetchScalarGridSpec(
            num_scalar_prefetch=0,
            grid=grid,
            in_specs=[
                pl.BlockSpec(_BLOCK_2D[kind1](rt, ct), _INDEX_2D[kind1]),
                pl.BlockSpec(_BLOCK_2D[kind2](rt, ct), _INDEX_2D[kind2]),
            ],
            out_specs=pl.BlockSpec((rt, ct), lambda i, j: (i, j)),
        ),
        compiler_params=pltpu.CompilerParams(
            dimension_semantics=("parallel", "parallel"),
        ),
    )(a, b)
    return out2.reshape(out_shape)


# ---------------------------------------------------------------------------
# General N-D fallback: broadcast patterns that don't collapse to 2-D (e.g. a
# size-1 axis sandwiched between non-broadcast axes). The small operand is
# still never materialized: its BlockSpec pins broadcast axes to block 0 and
# the kernel broadcasts on the VPU.
# ---------------------------------------------------------------------------
def _sub_nd(x1, x2, out_shape, out_dtype):
    # TODO(synk): blocks here are (1, ..., 1, P_tile, L_tile); shapes with huge
    # leading extents and tiny trailing dims pay extra per-grid-step overhead
    # compared to a fused 2-D layout.
    r = len(out_shape)
    s1 = (1,) * (r - x1.ndim) + tuple(int(d) for d in x1.shape)
    s2 = (1,) * (r - x2.ndim) + tuple(int(d) for d in x2.shape)
    a = x1.reshape(s1)  # prepending 1s is metadata-only
    b = x2.reshape(s2)

    lead = tuple(out_shape[:-2])
    P, L = out_shape[-2], out_shape[-1]
    itemsize = max(a.dtype.itemsize, b.dtype.itemsize,
                   jnp.dtype(out_dtype).itemsize)
    sub = _sublane_multiple(a.dtype, b.dtype, out_dtype)
    pr, pc = _plan_tiles(P, L, itemsize, sub,
                         prefer_split=(math.prod(lead) <= 1))

    grid = lead + (_cdiv(P, pr), _cdiv(L, pc))
    out_block = (1,) * len(lead) + (pr, pc)

    def block_for(s):
        return tuple(1 if s[d] == 1 else out_block[d] for d in range(r))

    def index_for(s):
        def imap(*g):
            return tuple(g[d] if s[d] != 1 else 0 for d in range(r))
        return imap

    return pl.pallas_call(
        _sub_kernel,
        out_shape=jax.ShapeDtypeStruct(tuple(out_shape), out_dtype),
        grid_spec=pltpu.PrefetchScalarGridSpec(
            num_scalar_prefetch=0,
            grid=grid,
            in_specs=[
                pl.BlockSpec(block_for(s1), index_for(s1)),
                pl.BlockSpec(block_for(s2), index_for(s2)),
            ],
            out_specs=pl.BlockSpec(out_block, lambda *g: g),
        ),
        compiler_params=pltpu.CompilerParams(
            dimension_semantics=("parallel",) * len(grid),
        ),
    )(a, b)


# ---------------------------------------------------------------------------
# Public entry point: torch.sub(x1, x2) forward.
# ---------------------------------------------------------------------------
@jax.jit
def pallas_sub(x1, x2):
    """out = x1 - x2 with NumPy/PyTorch-style broadcasting (torch.sub)."""
    # TODO(synk): torch.sub's optional `alpha` multiplier is not part of the
    # module's forward (it only passes two tensors), so it is not implemented.
    out_shape = tuple(int(d) for d in jnp.broadcast_shapes(x1.shape, x2.shape))
    out_dtype = jnp.result_type(x1.dtype, x2.dtype)

    if math.prod(out_shape) == 0:
        # A zero-extent grid would not lower; the result is an empty array.
        return jnp.zeros(out_shape, out_dtype)

    kind1 = _classify_2d(x1.shape, out_shape)
    kind2 = _classify_2d(x2.shape, out_shape)
    if kind1 is not None and kind2 is not None:
        return _sub_2d(x1, x2, kind1, kind2, out_shape, out_dtype)
    return _sub_nd(x1, x2, out_shape, out_dtype)


if __name__ == "__main__":
    key = jax.random.PRNGKey(0)
    k1, k2, k3, k4, k5 = jax.random.split(key, 5)

    # 1) Same-shape subtract (the module's basic forward).
    x1 = jax.random.normal(k1, (2, 4, 16, 16), dtype=jnp.float32)
    x2 = jax.random.normal(k2, (2, 4, 16, 16), dtype=jnp.float32)
    out = pallas_sub(x1, x2)
    jax.block_until_ready(out)
    ref = x1 - x2
    assert out.shape == ref.shape, f"shape mismatch: {out.shape} vs {ref.shape}"
    assert out.dtype == ref.dtype, f"dtype mismatch: {out.dtype} vs {ref.dtype}"
    assert jnp.array_equal(out, ref), "same-shape mismatch"

    # 2) General broadcasting (size-1 axes sandwiched between real axes).
    x3 = jax.random.normal(k3, (1, 4, 1, 16), dtype=jnp.float32)
    out_b = pallas_sub(x1, x3)
    jax.block_until_ready(out_b)
    assert jnp.array_equal(out_b, x1 - x3), "general broadcast mismatch"

    # 3) Trailing-dim ("bias") broadcast and scalar broadcast.
    bias = jax.random.normal(k4, (16,), dtype=jnp.float32)
    assert jnp.array_equal(pallas_sub(x1, bias), x1 - bias), "row broadcast mismatch"
    scal = jnp.array(0.5, dtype=jnp.float32)
    assert jnp.array_equal(pallas_sub(x1, scal), x1 - scal), "scalar mismatch"

    # 4) Mixed dtypes: promotion happens inside the kernel (bf16 DMA'd narrow).
    x2_bf16 = x2.astype(jnp.bfloat16)
    out_m = pallas_sub(x1, x2_bf16)
    ref_m = x1 - x2_bf16
    assert out_m.dtype == ref_m.dtype, "promoted dtype mismatch"
    assert jnp.allclose(out_m, ref_m, rtol=1e-6, atol=1e-6), "mixed-dtype mismatch"

    # 5) Lane-aligned multi-block path, plus a shape whose row count doesn't
    #    divide the row tile (exercises Pallas partial blocks; no wrapper pad).
    y1 = jax.random.normal(k5, (256, 512), dtype=jnp.float32)
    y2 = jax.random.normal(k1, (256, 512), dtype=jnp.float32)
    assert jnp.array_equal(pallas_sub(y1, y2), y1 - y2), "aligned mismatch"
    z1 = jax.random.normal(k2, (3, 5, 10, 16), dtype=jnp.float32)
    z2 = jax.random.normal(k3, (3, 5, 10, 16), dtype=jnp.float32)
    assert jnp.array_equal(pallas_sub(z1, z2), z1 - z2), "ragged-rows mismatch"

    print("KERNEL_OK")
</pallas_src>

<mosaic_0001>
module attributes {stable_mosaic.version = 11 : i64} {
  func.func @_sub_kernel(%arg0: i32, %arg1: i32, %arg2: memref<64x16xf32, #tpu.memory_space<vmem>>, %arg3: memref<64x16xf32, #tpu.memory_space<vmem>>, %arg4: memref<64x16xf32, #tpu.memory_space<vmem>>) attributes {dimension_semantics = [#tpu.dimension_semantics<parallel>, #tpu.dimension_semantics<parallel>], iteration_bounds = array<i64: 2, 1>, scalar_prefetch = 0 : i64, scratch_operands = 0 : i64, tpu.core_type = #tpu.core_type<tc>, window_params = [{transform_indices = @transform_0, window_bounds = array<i64: 64, 16>}, {transform_indices = @transform_1, window_bounds = array<i64: 64, 16>}, {transform_indices = @transform_2, window_bounds = array<i64: 64, 16>}]} {
    %c0 = arith.constant 0 : index
    %c0_0 = arith.constant 0 : index
    %0 = vector.load %arg2[%c0, %c0_0] : memref<64x16xf32, #tpu.memory_space<vmem>>, vector<64x16xf32>
    %c0_1 = arith.constant 0 : index
    %c0_2 = arith.constant 0 : index
    %1 = vector.load %arg3[%c0_1, %c0_2] : memref<64x16xf32, #tpu.memory_space<vmem>>, vector<64x16xf32>
    %2 = arith.subf %0, %1 : vector<64x16xf32>
    %c0_3 = arith.constant 0 : index
    %c0_4 = arith.constant 0 : index
    %3 = vector.load %arg4[%c0_3, %c0_4] : memref<64x16xf32, #tpu.memory_space<vmem>>, vector<64x16xf32>
    tpu.vector_store %arg4[%c0_3, %c0_4], %2 {strides = array<i32>} : memref<64x16xf32, #tpu.memory_space<vmem>>, vector<64x16xf32>,
    return
  }
  func.func @transform_0(%arg0: i32, %arg1: i32) -> (i32, i32) {
    %c0_i32 = arith.constant 0 : i32
    return %arg0, %arg1 : i32, i32
  }
  func.func @transform_1(%arg0: i32, %arg1: i32) -> (i32, i32) {
    %c0_i32 = arith.constant 0 : i32
    return %arg0, %arg1 : i32, i32
  }
  func.func @transform_2(%arg0: i32, %arg1: i32) -> (i32, i32) {
    %c0_i32 = arith.constant 0 : i32
    return %arg0, %arg1 : i32, i32
  }
}

</mosaic_0001>

<llo_original>
// kernel: pallas_sub.1
$region0: #{pallas_sub.1}
  #allocation0 [shape = 'u32[]', space=smem, size = 0x4, offset = 0x4, fixed_abs, tag = 'smem constant byte address 0x4 - core index']
  #allocation1 [shape = 'u32[144,128]{1,0:T(1,128)}', space=vmem, size = 0x12000, scoped, tag = 'internal scratch']
  %s0 = inlined_call_operand.hbm [shape: f32[128,16], index: 0, kind: input, shape index: {}]
  %s1 = inlined_call_operand.hbm [shape: f32[128,16], index: 1, kind: input, shape index: {}]
  %s2 = inlined_call_operand.hbm [shape: f32[128,16], index: 2, kind: output, shape index: {}]
  %s3 = sld [smem:[#allocation0]]
  $region49: #{pallas_sub.1} parent=0
    _
  %s5 = ssub.s32 1, %s3
  %s6 = scalar_select 0, %s5, %s3
  $region1: #{pallas_sub.1} parent=0
    #allocation2 [shape = 'u8[65536]{0}', space=vmem, size = 0x10000, scoped, tag = 'input window, operand 0']
    #allocation3 [shape = 's32[2]{0}', space=sflag, size = 0x8, scoped, tag = 'scoped memory for pallas_sub.1']
    #allocation4 [shape = 's32[2]{0}', space=sflag, size = 0x8, scoped, tag = 'scoped memory for pallas_sub.1']
    #allocation5 [shape = 'u8[65536]{0}', space=vmem, size = 0x10000, scoped, tag = 'input window, operand 1']
    #allocation6 [shape = 's32[2]{0}', space=sflag, size = 0x8, scoped, tag = 'scoped memory for pallas_sub.1']
    #allocation7 [shape = 'u8[65536]{0}', space=vmem, size = 0x10000, scoped, tag = 'output window, operand 0']
    %7 = vsyncpa [#allocation3], 0
    %s8 = scalar_lea.sflag [#allocation3], 1
    %9 = vsyncpa %s8, 0
    %10 = vsyncpa [#allocation6], 0
    %s11 = scalar_lea.sflag [#allocation6], 1
    %12 = vsyncpa %s11, 0
    %13 = vsyncpa [#allocation4], 0
    %s14 = scalar_lea.sflag [#allocation4], 1
    %15 = vsyncpa %s14, 0
    loop: start=0, step=1, limit=4
    $region2: #{pallas_sub.1} parent=1 // loop_pre_header
      _
    $region3: #{pallas_sub.1} parent=1 // loop_header
      %s17 = sphi 0, %s21
      %p18 = scmp.ge.s32.totalorder %s17, 4
      %s24 = sphi 0, %s36
      %s25 = sphi 0, %s32
      %s26 = sphi 0, %s24
      %s27 = sphi 0, %s25
      %s28 = sphi 0, %s26
      %s29 = sphi 0, %s27
      %s41 = sphi 0, %s43
      %s44 = sphi 0, %s41
      %s45 = sphi 0, %s44
      %s61 = sphi 0, %s45
      %s69 = sphi 0, %s71
      %s72 = sphi 0, %s69
      %s73 = sphi 0, %s72
      %s89 = sphi 0, %s73
      %s97 = sphi 0, %s99
      %s100 = sphi 0, %s97
      %s101 = sphi 0, %s100
      %s117 = sphi 0, %s101
    $region4: #{pallas_sub.1} parent=1 // loop_header_branch
      %20 = sbr.rel (%p18) target = $region8
    $region5: #{pallas_sub.1} parent=1 // loop_body
      %s22 = ssub.s32 %s17, 1
      %s23 = ssub.s32 %s17, 2
      %s30 = sadd.s32 1, %s25
      %p31 = scmp.ge.s32.totalorder %s30, 1
      %s32 = scalar_select %p31, 0, %s30
      %s33 = sadd.s32 1, %s24
      %s34 = scalar_select %p31, %s33, %s24
      %p35 = scmp.ge.s32.totalorder %s34, 2
      %s36 = scalar_select %p35, 0, %s34
      %s37 = ssub.s32 %s24, %s36
      %s38 = ssub.s32 %s25, %s32
      %s39 = sor.u32 %s37, %s38
      %p40 = scmp.eq.s32.totalorder %s39, 0
      %s42 = sadd.s32 %s41, 1
      %s43 = scalar_select %p40, %s41, %s42
      %p46 = pneg %p40
      %p47 = scmp.eq.s32.totalorder %s17, 1
      %p48 = por %p46, %p47
      %p49 = scmp.ne.s32.totalorder %s41, %s44
      %p50 = scmp.eq.s32.totalorder %s17, 0
      %p51 = por %p49, %p50
      %p52 = scmp.ne.s32.totalorder %s41, %s44
      %p53 = scmp.eq.s32.totalorder %s22, 1
      %p54 = por %p52, %p53
      %p55 = scmp.ne.s32.totalorder %s44, %s45
      %p56 = scmp.eq.s32.totalorder %s22, 0
      %p57 = por %p55, %p56
      %p58 = scmp.ne.s32.totalorder %s44, %s45
      %p59 = scmp.eq.s32.totalorder %s23, 1
      %p60 = por %p58, %p59
      %p62 = scmp.ne.s32.totalorder %s45, %s61
      %p63 = scmp.eq.s32.totalorder %s23, 0
      %p64 = por %p62, %p63
      %s65 = ssub.s32 %s24, %s36
      %s66 = ssub.s32 %s25, %s32
      %s67 = sor.u32 %s65, %s66
      %p68 = scmp.eq.s32.totalorder %s67, 0
      %s70 = sadd.s32 %s69, 1
      %s71 = scalar_select %p68, %s69, %s70
      %p74 = pneg %p68
      %p75 = scmp.eq.s32.totalorder %s17, 1
      %p76 = por %p74, %p75
      %p77 = scmp.ne.s32.totalorder %s69, %s72
      %p78 = scmp.eq.s32.totalorder %s17, 0
      %p79 = por %p77, %p78
      %p80 = scmp.ne.s32.totalorder %s69, %s72
      %p81 = scmp.eq.s32.totalorder %s22, 1
      %p82 = por %p80, %p81
      %p83 = scmp.ne.s32.totalorder %s72, %s73
      %p84 = scmp.eq.s32.totalorder %s22, 0
      %p85 = por %p83, %p84
      %p86 = scmp.ne.s32.totalorder %s72, %s73
      %p87 = scmp.eq.s32.totalorder %s23, 1
      %p88 = por %p86, %p87
      %p90 = scmp.ne.s32.totalorder %s73, %s89
      %p91 = scmp.eq.s32.totalorder %s23, 0
      %p92 = por %p90, %p91
      %s93 = ssub.s32 %s24, %s36
      %s94 = ssub.s32 %s25, %s32
      %s95 = sor.u32 %s93, %s94
      %p96 = scmp.eq.s32.totalorder %s95, 0
      %s98 = sadd.s32 %s97, 1
      %s99 = scalar_select %p96, %s97, %s98
      %p102 = pneg %p96
      %p103 = scmp.eq.s32.totalorder %s17, 1
      %p104 = por %p102, %p103
      %p105 = scmp.ne.s32.totalorder %s97, %s100
      %p106 = scmp.eq.s32.totalorder %s17, 0
      %p107 = por %p105, %p106
      %p108 = scmp.ne.s32.totalorder %s97, %s100
      %p109 = scmp.eq.s32.totalorder %s22, 1
      %p110 = por %p108, %p109
      %p111 = scmp.ne.s32.totalorder %s100, %s101
      %p112 = scmp.eq.s32.totalorder %s22, 0
      %p113 = por %p111, %p112
      %p114 = scmp.ne.s32.totalorder %s100, %s101
      %p115 = scmp.eq.s32.totalorder %s23, 1
      %p116 = por %p114, %p115
      %p118 = scmp.ne.s32.totalorder %s101, %s117
      %p119 = scmp.eq.s32.totalorder %s23, 0
      %p120 = por %p118, %p119
      %p121 = scmp.le.s32.totalorder 1, %s17
      %p122 = scmp.lt.s32.totalorder %s17, 3
      %p123 = pnand %p121, %p122
      %p124 = pneg %p123
      // Predicated region
      $region9: #{pallas_sub.1} parent=5 // pred_check
        _
      $region10: #{pallas_sub.1} parent=5 // pred_check_branch
        %126 = sbr.rel (%p123) target = $region12
      $region11: #{pallas_sub.1} parent=5 // pred_region
        %s127 = ssub.s32 %s17, 1
      $region12: #{pallas_sub.1} parent=5 // pred_fallthru
        _
      %p128 = scmp.lt.s32.totalorder %s17, 2
      // Predicated region
      $region13: #{pallas_sub.1} parent=5 // pred_check
        %p129 = pneg %p128
      $region14: #{pallas_sub.1} parent=5 // pred_check_branch
        %131 = sbr.rel (%p129) target = $region16
      $region15: #{pallas_sub.1} parent=5 // pred_region
        // Predicated region
        $region17: #{pallas_sub.1} parent=15 // pred_check
          %p132 = pneg %p51
        $region18: #{pallas_sub.1} parent=15 // pred_check_branch
          %134 = sbr.rel (%p132) target = $region20
        $region19: #{pallas_sub.1} parent=15 // pred_region
          %s135 = sand.u32 %s41, 1
          %s136 = scalar_lea.sflag [#allocation3], %s135
          %s137 = sand.u32 %s41, 1
          %s138 = smul.addr %s137, 64
          %s139 = scalar_lea.vmem [#allocation2], %s138
          %s140 = smul.u32 8, %s24
          %s142 = ssub.s32 1024, 1024
          %143 = vsyncadd %s136, %s142
          %s144 = sadd.s32 %s25, %s140
          %s145 = smul.addr %s144, 128
          %s146 = scalar_lea.hbm %s0, %s145
          %s147 = sshll.u32 %s139, 4
          %s148 = int_to_ptr.vmem [resolvable:$true] %s147
          %153 = dma.hbm_to_vmem [thread:$0]  %s146, 1024, %s148, %s136, 128, 128, 8
        $region20: #{pallas_sub.1} parent=15 // pred_fallthru
          _
        // Predicated region
        $region21: #{pallas_sub.1} parent=15 // pred_check
          %p154 = pneg %p79
        $region22: #{pallas_sub.1} parent=15 // pred_check_branch
          %156 = sbr.rel (%p154) target = $region24
        $region23: #{pallas_sub.1} parent=15 // pred_region
          %s157 = sand.u32 %s69, 1
          %s158 = scalar_lea.sflag [#allocation6], %s157
          %s159 = sand.u32 %s69, 1
          %s160 = smul.addr %s159, 64
          %s161 = scalar_lea.vmem [#allocation5], %s160
          %s162 = smul.u32 8, %s24
          %s164 = ssub.s32 1024, 1024
          %165 = vsyncadd %s158, %s164
          %s166 = sadd.s32 %s25, %s162
          %s167 = smul.addr %s166, 128
          %s168 = scalar_lea.hbm %s1, %s167
          %s169 = sshll.u32 %s161, 4
          %s170 = int_to_ptr.vmem [resolvable:$true] %s169
          %175 = dma.hbm_to_vmem [thread:$0]  %s168, 1024, %s170, %s158, 128, 128, 8
        $region24: #{pallas_sub.1} parent=15 // pred_fallthru
          _
      $region16: #{pallas_sub.1} parent=5 // pred_fallthru
        _
      %p176 = scmp.le.s32.totalorder 1, %s17
      %p177 = scmp.lt.s32.totalorder %s17, 3
      %p178 = pnand %p176, %p177
      %p179 = pneg %p178
      // Predicated region
      $region25: #{pallas_sub.1} parent=5 // pred_check
        _
      $region26: #{pallas_sub.1} parent=5 // pred_check_branch
        %181 = sbr.rel (%p178) target = $region28
      $region27: #{pallas_sub.1} parent=5 // pred_region
        %s182 = ssub.s32 %s17, 1
        %s183 = sand.u32 %s44, 1
        %s184 = scalar_lea.sflag [#allocation3], %s183
        %s185 = sand.u32 %s44, 1
        %s186 = smul.addr %s185, 64
        %s187 = scalar_lea.vmem [#allocation2], %s186
        // Predicated region
        $region29: #{pallas_sub.1} parent=27 // pred_check
          %p188 = pneg %p57
        $region30: #{pallas_sub.1} parent=27 // pred_check_branch
          %190 = sbr.rel (%p188) target = $region32
        $region31: #{pallas_sub.1} parent=27 // pred_region
          %191 = dma.done %s184, 1024
        $region32: #{pallas_sub.1} parent=27 // pred_fallthru
          _
        %s192 = sand.u32 %s72, 1
        %s193 = scalar_lea.sflag [#allocation6], %s192
        %s194 = sand.u32 %s72, 1
        %s195 = smul.addr %s194, 64
        %s196 = scalar_lea.vmem [#allocation5], %s195
        // Predicated region
        $region33: #{pallas_sub.1} parent=27 // pred_check
          %p197 = pneg %p85
        $region34: #{pallas_sub.1} parent=27 // pred_check_branch
          %199 = sbr.rel (%p197) target = $region36
        $region35: #{pallas_sub.1} parent=27 // pred_region
          %200 = dma.done %s193, 1024
        $region36: #{pallas_sub.1} parent=27 // pred_fallthru
          _
        %s201 = sand.u32 %s44, 1
        %s202 = scalar_lea.sflag [#allocation3], %s201
        %s203 = sand.u32 %s44, 1
        %s204 = smul.addr %s203, 64
        %s205 = scalar_lea.vmem [#allocation2], %s204
        %p206 = pneg %p57
        %p207 = pneg %p54
        %s208 = sand.u32 %s72, 1
        %s209 = scalar_lea.sflag [#allocation6], %s208
        %s210 = sand.u32 %s72, 1
        %s211 = smul.addr %s210, 64
        %s212 = scalar_lea.vmem [#allocation5], %s211
        %p213 = pneg %p85
        %p214 = pneg %p82
        %p215 = pneg %p113
        %p216 = pneg %p110
        %s217 = sand.u32 %s100, 1
        %s218 = scalar_lea.sflag [#allocation4], %s217
        %s219 = sand.u32 %s100, 1
        %s220 = smul.addr %s219, 64
        %s221 = scalar_lea.vmem [#allocation7], %s220
        %s222 = smul.u32 8, %s26
        %s223 = smul.u32 8, %s26
        %s224 = smul.u32 8, %s26
        %v225 = vld [vmem:[%s187] sm:$0xff]
        %v226 = vld [vmem:[%s187 + $0x8] sm:$0xff]
        %v227 = vld [vmem:[%s187 + $0x10] sm:$0xff]
        %v228 = vld [vmem:[%s187 + $0x18] sm:$0xff]
        %v229 = vld [vmem:[%s187 + $0x20] sm:$0xff]
        %v230 = vld [vmem:[%s187 + $0x28] sm:$0xff]
        %v231 = vld [vmem:[%s187 + $0x30] sm:$0xff]
        %v232 = vld [vmem:[%s187 + $0x38] sm:$0xff]
        %v233 = vld [vmem:[%s196] sm:$0xff]
        %v234 = vld [vmem:[%s196 + $0x8] sm:$0xff]
        %v235 = vld [vmem:[%s196 + $0x10] sm:$0xff]
        %v236 = vld [vmem:[%s196 + $0x18] sm:$0xff]
        %v237 = vld [vmem:[%s196 + $0x20] sm:$0xff]
        %v238 = vld [vmem:[%s196 + $0x28] sm:$0xff]
        %v239 = vld [vmem:[%s196 + $0x30] sm:$0xff]
        %v240 = vld [vmem:[%s196 + $0x38] sm:$0xff]
        %v241 = vsub.f32 %v225, %v233
        %v242 = vsub.f32 %v226, %v234
        %v243 = vsub.f32 %v227, %v235
        %v244 = vsub.f32 %v228, %v236
        %v245 = vsub.f32 %v229, %v237
        %v246 = vsub.f32 %v230, %v238
        %v247 = vsub.f32 %v231, %v239
        %v248 = vsub.f32 %v232, %v240
        %vm249 = vcmask 130048
        %250 = vst.msk [vmem:[%s221] sm:$0xff] %vm249, %v241
        %251 = vst.msk [vmem:[%s221 + $0x8] sm:$0xff] %vm249, %v242
        %252 = vst.msk [vmem:[%s221 + $0x10] sm:$0xff] %vm249, %v243
        %253 = vst.msk [vmem:[%s221 + $0x18] sm:$0xff] %vm249, %v244
        %254 = vst.msk [vmem:[%s221 + $0x20] sm:$0xff] %vm249, %v245
        %255 = vst.msk [vmem:[%s221 + $0x28] sm:$0xff] %vm249, %v246
        %256 = vst.msk [vmem:[%s221 + $0x30] sm:$0xff] %vm249, %v247
        %257 = vst.msk [vmem:[%s221 + $0x38] sm:$0xff] %vm249, %v248
        %s258 = sand.u32 %s100, 1
        %s259 = scalar_lea.sflag [#allocation4], %s258
        %s260 = sand.u32 %s100, 1
        %s261 = smul.addr %s260, 64
        %s262 = scalar_lea.vmem [#allocation7], %s261
        // Predicated region
        $region37: #{pallas_sub.1} parent=27 // pred_check
          %p263 = pneg %p110
        $region38: #{pallas_sub.1} parent=27 // pred_check_branch
          %265 = sbr.rel (%p263) target = $region40
        $region39: #{pallas_sub.1} parent=27 // pred_region
          %s266 = smul.u32 8, %s26
          %s268 = ssub.s32 1024, 1024
          %269 = vsyncadd %s259, %s268
          %s270 = sadd.s32 %s27, %s266
          %s271 = smul.addr %s270, 128
          %s272 = scalar_lea.hbm %s2, %s271
          %s273 = sshll.u32 %s262, 4
          %s274 = int_to_ptr.vmem [resolvable:$true] %s273
          %279 = dma.vmem_to_hbm [thread:$0]  %s274, 1024, %s272, %s259, 128, 128, 8
        $region40: #{pallas_sub.1} parent=27 // pred_fallthru
          _
      $region28: #{pallas_sub.1} parent=5 // pred_fallthru
        _
      %p280 = scmp.le.s32.totalorder 2, %s17
      // Predicated region
      $region41: #{pallas_sub.1} parent=5 // pred_check
        %p281 = pneg %p280
      $region42: #{pallas_sub.1} parent=5 // pred_check_branch
        %283 = sbr.rel (%p281) target = $region44
      $region43: #{pallas_sub.1} parent=5 // pred_region
        %s284 = ssub.s32 %s17, 2
        // Predicated region
        $region45: #{pallas_sub.1} parent=43 // pred_check
          %p285 = pneg %p116
        $region46: #{pallas_sub.1} parent=43 // pred_check_branch
          %287 = sbr.rel (%p285) target = $region48
        $region47: #{pallas_sub.1} parent=43 // pred_region
          %s288 = sand.u32 %s101, 1
          %s289 = scalar_lea.sflag [#allocation4], %s288
          %s290 = sand.u32 %s101, 1
          %s291 = smul.addr %s290, 64
          %s292 = scalar_lea.vmem [#allocation7], %s291
          %293 = dma.done %s289, 1024
        $region48: #{pallas_sub.1} parent=43 // pred_fallthru
          _
      $region44: #{pallas_sub.1} parent=5 // pred_fallthru
        _
    $region6: #{pallas_sub.1} parent=1 // loop_footer
      %s21 = sadd.s32 1, %s17
    $region7: #{pallas_sub.1} parent=1 // loop_footer_branch
      %16 = sbr.rel target = $region3
    $region8: #{pallas_sub.1} parent=1 // loop_exit
      _
    %294 = vsyncpa [#allocation3], 1
    %s295 = scalar_lea.sflag [#allocation3], 1
    %296 = vsyncpa %s295, 1
    %297 = vsyncpa [#allocation6], 1
    %s298 = scalar_lea.sflag [#allocation6], 1
    %299 = vsyncpa %s298, 1
    %300 = vsyncpa [#allocation4], 1
    %s301 = scalar_lea.sflag [#allocation4], 1
    %302 = vsyncpa %s301, 1

</llo_original>
